<compile_context>
chip_gen: v5e
topology: v5e:2x2
jax: 0.10.0
libtpu: 0.0.40
codegen_flags: <defaults>
</compile_context>

<pallas_src>
import jax
import jax.numpy as jnp
from jax import lax
from jax.experimental import pallas as pl
from jax.experimental.pallas import tpu as pltpu


def _round_up(n: int, m: int) -> int:
    return ((n + m - 1) // m) * m


def qnetwork_kernel(x_ref, w1_ref, b1_ref, w2_ref, b2_ref, w3t_ref, b3t_ref, o_ref):
    """One batch tile: relu(x@W1+b1) -> relu(.@W2+b2) -> last layer emitted transposed.

    x_ref is a (TB, state_size) tile; weights/biases are full arrays resident in VMEM
    across all grid steps (constant index_maps). The last layer is computed as
    W3t contracted against h2 along the feature dim (dot_general), producing an
    (A_pad, TB) tile: batch rides the lane axis so the output store is fully lane-dense.
    h1/h2 are VMEM-resident intermediates; matmuls accumulate in f32 on the MXU.
    """
    x = x_ref[...]                                                     # (TB, S)
    h1 = jnp.dot(x, w1_ref[...], preferred_element_type=jnp.float32) + b1_ref[...]
    h1 = jnp.maximum(h1, 0.0)                                          # (TB, 128)
    h2 = jnp.dot(h1, w2_ref[...], preferred_element_type=jnp.float32) + b2_ref[...]
    h2 = jnp.maximum(h2, 0.0)                                          # (TB, 64)
    # (A_pad, 64) x (TB, 64) contracted on dim-1 of both -> (A_pad, TB)
    o_ref[...] = lax.dot_general(
        w3t_ref[...], h2, (((1,), (1,)), ((), ())),
        preferred_element_type=jnp.float32) + b3t_ref[...]


def _choose_batch_tile(B: int, block_batch: int, min_grid_steps: int) -> int:
    """TB must equal B (full-extent block) or be a multiple of 128 (batch sits on the
    lane axis of the transposed output)."""
    if B <= 256:
        return B  # tiny batch: single full-extent block (always a legal block shape)
    tb = _round_up(pl.cdiv(B, max(1, min_grid_steps)), 128)
    tb = max(128, min(tb, block_batch))
    return tb


def _vmem_limit_bytes(TB: int, state_size: int, a_pad: int) -> int:
    """Size the scoped-VMEM request from the actual footprint, capped below physical."""
    tile_in = TB * state_size * 4
    tile_out = a_pad * TB * 4
    hidden = TB * (128 + 64) * 4  # h1 + h2 live in VMEM, not vregs
    weights = (state_size * 128 + 128 + 128 * 64 + 64 + a_pad * 64 + a_pad) * 4
    needed = 2 * (tile_in + tile_out) + hidden + 2 * weights + (4 << 20)
    try:
        cap = getattr(pltpu.get_tpu_info(), "vmem_capacity_bytes", None) or (64 << 20)
    except Exception:
        cap = 64 << 20  # conservative: v7x physical VMEM per TC
    return int(min(max(needed, 32 << 20), (cap * 3) // 4))


def qnetwork_forward(x, params, *, block_batch: int = 4096, min_grid_steps: int = 4):
    """Run the QNetwork forward pass via pallas_call.

    x: (B, state_size) float32
    params: dict with w1 (state,128), b1 (1,128), w2 (128,64), b2 (1,64),
            w3 (64,action), b3 (1,action) — weights already stored as (in, out).
    Returns (B, action_size) float32.
    """
    w1, b1, w2, b2, w3, b3 = (params["w1"], params["b1"], params["w2"],
                              params["b2"], params["w3"], params["b3"])
    B, state_size = x.shape
    action_size = w3.shape[1]
    assert action_size >= 1

    # ---- last layer pre-transposed & padded to a multiple of 8 sublanes -----
    a_pad = max(8, _round_up(action_size, 8))
    w3t = jnp.pad(w3.T, ((0, a_pad - action_size), (0, 0)))            # (a_pad, 64)
    b3t = jnp.pad(b3.reshape(action_size, 1),
                  ((0, a_pad - action_size), (0, 0)))                  # (a_pad, 1)

    # ---- batch tiling: no wrapper-side padding; Pallas masks the edge block --
    block_batch = max(128, _round_up(block_batch, 128))
    TB = _choose_batch_tile(B, block_batch, min_grid_steps)
    grid = (pl.cdiv(B, TB),)

    # ---- advisory cost estimate ---------------------------------------------
    flops = 2 * B * (state_size * 128 + 128 * 64 + 64 * a_pad)
    bytes_accessed = (B * state_size * 4 + a_pad * B * 4
                      + (state_size * 128 + 128 + 128 * 64 + 64
                         + a_pad * 64 + a_pad) * 4)
    cost = pl.CostEstimate(flops=flops, transcendentals=0,
                           bytes_accessed=bytes_accessed)

    def const(a):
        nd = a.ndim
        return pl.BlockSpec(a.shape, lambda i, _nd=nd: (0,) * _nd)

    out_t = pl.pallas_call(
        qnetwork_kernel,
        out_shape=jax.ShapeDtypeStruct((a_pad, B), jnp.float32),
        grid=grid,
        in_specs=[
            pl.BlockSpec((TB, state_size), lambda i: (i, 0)),  # x: tiled over batch
            const(w1), const(b1),                              # weights VMEM-resident
            const(w2), const(b2),
            const(w3t), const(b3t),
        ],
        out_specs=pl.BlockSpec((a_pad, TB), lambda i: (0, i)), # batch on the lane axis
        compiler_params=pltpu.CompilerParams(
            dimension_semantics=("parallel",),                 # megacore sharding on v7x
            vmem_limit_bytes=_vmem_limit_bytes(TB, state_size, a_pad),
        ),
        cost_estimate=cost,
    )(x, w1, b1, w2, b2, w3t, b3t)

    # tiny (<= 8 rows) slice + transpose back to (B, action_size)
    return out_t[:action_size, :].T


def init_qnetwork_params(key, state_size, action_size):
    """Deterministic init mimicking PyTorch nn.Linear default:
    U(-1/sqrt(fan_in), 1/sqrt(fan_in)) for both weight and bias."""
    dims = [(state_size, 128), (128, 64), (64, action_size)]
    params = {}
    for i, (fan_in, fan_out) in enumerate(dims, start=1):
        key, kw, kb = jax.random.split(key, 3)
        bound = 1.0 / jnp.sqrt(jnp.float32(fan_in))
        # stored directly as (in, out) == W.T of the PyTorch (out, in) weight
        params[f"w{i}"] = jax.random.uniform(
            kw, (fan_in, fan_out), jnp.float32, minval=-bound, maxval=bound)
        params[f"b{i}"] = jax.random.uniform(
            kb, (1, fan_out), jnp.float32, minval=-bound, maxval=bound)
    return params


def qnetwork_reference(x, params):
    """Pure-JAX reference for correctness checking."""
    h = jnp.maximum(x @ params["w1"] + params["b1"], 0.0)
    h = jnp.maximum(h @ params["w2"] + params["b2"], 0.0)
    return h @ params["w3"] + params["b3"]


if __name__ == "__main__":
    state_size = 8
    action_size = 4
    batch = 2

    key = jax.random.PRNGKey(0)
    key, kx = jax.random.split(key)
    x = jax.random.normal(kx, (batch, state_size), dtype=jnp.float32)
    params = init_qnetwork_params(key, state_size, action_size)

    # small-batch correctness (single full-extent block path)
    out = jax.block_until_ready(qnetwork_forward(x, params))
    ref = qnetwork_reference(x, params)
    assert out.shape == (batch, action_size), out.shape
    assert jnp.allclose(out, ref, atol=1e-5, rtol=1e-5), "mismatch vs reference (small batch)"

    # larger batch exercises the multi-step pipelined grid with a masked partial edge block
    key, kx2 = jax.random.split(key)
    xb = jax.random.normal(kx2, (1000, state_size), dtype=jnp.float32)
    outb = jax.block_until_ready(qnetwork_forward(xb, params))
    refb = qnetwork_reference(xb, params)
    assert outb.shape == (1000, action_size), outb.shape
    assert jnp.allclose(outb, refb, atol=1e-4, rtol=1e-4), "mismatch vs reference (large batch)"

    print("KERNEL_OK")
</pallas_src>

<mosaic_0001>
module attributes {stable_mosaic.version = 11 : i64} {
  func.func @qnetwork_kernel(%arg0: i32, %arg1: memref<2x8xf32, #tpu.memory_space<vmem>>, %arg2: memref<8x128xf32, #tpu.memory_space<vmem>>, %arg3: memref<1x128xf32, #tpu.memory_space<vmem>>, %arg4: memref<128x64xf32, #tpu.memory_space<vmem>>, %arg5: memref<1x64xf32, #tpu.memory_space<vmem>>, %arg6: memref<8x64xf32, #tpu.memory_space<vmem>>, %arg7: memref<8x1xf32, #tpu.memory_space<vmem>>, %arg8: memref<8x2xf32, #tpu.memory_space<vmem>>) attributes {dimension_semantics = [#tpu.dimension_semantics<parallel>], iteration_bounds = array<i64: 1>, scalar_prefetch = 0 : i64, scratch_operands = 0 : i64, tpu.core_type = #tpu.core_type<tc>, window_params = [{transform_indices = @transform_0, window_bounds = array<i64: 2, 8>}, {pipeline_mode = #tpu.pipeline_mode<synchronous>, transform_indices = @transform_1, window_bounds = array<i64: 8, 128>}, {pipeline_mode = #tpu.pipeline_mode<synchronous>, transform_indices = @transform_2, window_bounds = array<i64: 1, 128>}, {pipeline_mode = #tpu.pipeline_mode<synchronous>, transform_indices = @transform_3, window_bounds = array<i64: 128, 64>}, {pipeline_mode = #tpu.pipeline_mode<synchronous>, transform_indices = @transform_4, window_bounds = array<i64: 1, 64>}, {pipeline_mode = #tpu.pipeline_mode<synchronous>, transform_indices = @transform_5, window_bounds = array<i64: 8, 64>}, {pipeline_mode = #tpu.pipeline_mode<synchronous>, transform_indices = @transform_6, window_bounds = array<i64: 8, 1>}, {transform_indices = @transform_7, window_bounds = array<i64: 8, 2>}]} {
    %c0 = arith.constant 0 : index
    %c0_0 = arith.constant 0 : index
    %0 = vector.load %arg1[%c0, %c0_0] : memref<2x8xf32, #tpu.memory_space<vmem>>, vector<2x8xf32>
    %c0_1 = arith.constant 0 : index
    %c0_2 = arith.constant 0 : index
    %1 = vector.load %arg2[%c0_1, %c0_2] : memref<8x128xf32, #tpu.memory_space<vmem>>, vector<8x128xf32>
    %cst = arith.constant dense<0.000000e+00> : vector<2x128xf32>
    %2 = tpu.matmul %0, %1, %cst {dimension_numbers = #tpu.dot_dimension_numbers<[1], [0], [0], [1], [0, 0, 1, 1], [], []>} : vector<2x8xf32>, vector<8x128xf32>, vector<2x128xf32> -> vector<2x128xf32>
    %c0_3 = arith.constant 0 : index
    %c0_4 = arith.constant 0 : index
    %3 = vector.load %arg3[%c0_3, %c0_4] : memref<1x128xf32, #tpu.memory_space<vmem>>, vector<1x128xf32>
    %4 = vector.broadcast %3 : vector<1x128xf32> to vector<2x128xf32>
    %5 = arith.addf %2, %4 : vector<2x128xf32>
    %cst_5 = arith.constant 0.000000e+00 : f32
    %6 = vector.broadcast %cst_5 : f32 to vector<2x128xf32>
    %7 = arith.maximumf %5, %6 : vector<2x128xf32>
    %c0_6 = arith.constant 0 : index
    %c0_7 = arith.constant 0 : index
    %8 = vector.load %arg4[%c0_6, %c0_7] : memref<128x64xf32, #tpu.memory_space<vmem>>, vector<128x64xf32>
    %cst_8 = arith.constant dense<0.000000e+00> : vector<2x64xf32>
    %9 = tpu.matmul %7, %8, %cst_8 {dimension_numbers = #tpu.dot_dimension_numbers<[1], [0], [0], [1], [0, 0, 1, 1], [], []>} : vector<2x128xf32>, vector<128x64xf32>, vector<2x64xf32> -> vector<2x64xf32>
    %c0_9 = arith.constant 0 : index
    %c0_10 = arith.constant 0 : index
    %10 = vector.load %arg5[%c0_9, %c0_10] : memref<1x64xf32, #tpu.memory_space<vmem>>, vector<1x64xf32>
    %11 = vector.broadcast %10 : vector<1x64xf32> to vector<2x64xf32>
    %12 = arith.addf %9, %11 : vector<2x64xf32>
    %cst_11 = arith.constant 0.000000e+00 : f32
    %13 = vector.broadcast %cst_11 : f32 to vector<2x64xf32>
    %14 = arith.maximumf %12, %13 : vector<2x64xf32>
    %c0_12 = arith.constant 0 : index
    %c0_13 = arith.constant 0 : index
    %15 = vector.load %arg6[%c0_12, %c0_13] : memref<8x64xf32, #tpu.memory_space<vmem>>, vector<8x64xf32>
    %cst_14 = arith.constant dense<0.000000e+00> : vector<8x2xf32>
    %16 = tpu.matmul %15, %14, %cst_14 {dimension_numbers = #tpu.dot_dimension_numbers<[1], [1], [0], [0], [0, 0, 1, 0], [], []>} : vector<8x64xf32>, vector<2x64xf32>, vector<8x2xf32> -> vector<8x2xf32>
    %c0_15 = arith.constant 0 : index
    %c0_16 = arith.constant 0 : index
    %17 = vector.load %arg7[%c0_15, %c0_16] : memref<8x1xf32, #tpu.memory_space<vmem>>, vector<8x1xf32>
    %18 = vector.broadcast %17 : vector<8x1xf32> to vector<8x2xf32>
    %19 = arith.addf %16, %18 : vector<8x2xf32>
    %c0_17 = arith.constant 0 : index
    %c0_18 = arith.constant 0 : index
    %20 = vector.load %arg8[%c0_17, %c0_18] : memref<8x2xf32, #tpu.memory_space<vmem>>, vector<8x2xf32>
    tpu.vector_store %arg8[%c0_17, %c0_18], %19 {strides = array<i32>} : memref<8x2xf32, #tpu.memory_space<vmem>>, vector<8x2xf32>,
    return
  }
  func.func @transform_0(%arg0: i32) -> (i32, i32) {
    %c0_i32 = arith.constant 0 : i32
    %c0_i32_0 = arith.constant 0 : i32
    return %arg0, %c0_i32 : i32, i32
  }
  func.func @transform_1(%arg0: i32) -> (i32, i32) {
    %c0_i32 = arith.constant 0 : i32
    %c0_i32_0 = arith.constant 0 : i32
    %c0_i32_1 = arith.constant 0 : i32
    return %c0_i32, %c0_i32_0 : i32, i32
  }
  func.func @transform_2(%arg0: i32) -> (i32, i32) {
    %c0_i32 = arith.constant 0 : i32
    %c0_i32_0 = arith.constant 0 : i32
    %c0_i32_1 = arith.constant 0 : i32
    return %c0_i32, %c0_i32_0 : i32, i32
  }
  func.func @transform_3(%arg0: i32) -> (i32, i32) {
    %c0_i32 = arith.constant 0 : i32
    %c0_i32_0 = arith.constant 0 : i32
    %c0_i32_1 = arith.constant 0 : i32
    return %c0_i32, %c0_i32_0 : i32, i32
  }
  func.func @transform_4(%arg0: i32) -> (i32, i32) {
    %c0_i32 = arith.constant 0 : i32
    %c0_i32_0 = arith.constant 0 : i32
    %c0_i32_1 = arith.constant 0 : i32
    return %c0_i32, %c0_i32_0 : i32, i32
  }
  func.func @transform_5(%arg0: i32) -> (i32, i32) {
    %c0_i32 = arith.constant 0 : i32
    %c0_i32_0 = arith.constant 0 : i32
    %c0_i32_1 = arith.constant 0 : i32
    return %c0_i32, %c0_i32_0 : i32, i32
  }
  func.func @transform_6(%arg0: i32) -> (i32, i32) {
    %c0_i32 = arith.constant 0 : i32
    %c0_i32_0 = arith.constant 0 : i32
    %c0_i32_1 = arith.constant 0 : i32
    return %c0_i32, %c0_i32_0 : i32, i32
  }
  func.func @transform_7(%arg0: i32) -> (i32, i32) {
    %c0_i32 = arith.constant 0 : i32
    %c0_i32_0 = arith.constant 0 : i32
    return %c0_i32, %arg0 : i32, i32
  }
}

</mosaic_0001>

<llo_original>
// kernel: tpu_custom_call.1
$region0: #{tpu_custom_call.1}
  #allocation0 [shape = 'u32[]', space=smem, size = 0x4, offset = 0x4, fixed_abs, tag = 'smem constant byte address 0x4 - core index']
  #allocation1 [shape = 'u32[72,128]{1,0:T(1,128)}', space=vmem, size = 0x9000, scoped, tag = 'internal scratch']
  %s0 = inlined_call_operand.vmem [shape: f32[2,8], index: 0, kind: input, shape index: {}]
  %s1 = inlined_call_operand.vmem [shape: f32[8,128], index: 1, kind: input, shape index: {}]
  %s2 = inlined_call_operand.vmem [shape: f32[1,128], index: 2, kind: input, shape index: {}]
  %s3 = inlined_call_operand.vmem [shape: f32[128,64], index: 3, kind: input, shape index: {}]
  %s4 = inlined_call_operand.vmem [shape: f32[1,64], index: 4, kind: input, shape index: {}]
  %s5 = inlined_call_operand.vmem [shape: f32[8,64], index: 5, kind: input, shape index: {}]
  %s6 = inlined_call_operand.vmem [shape: f32[8,1], index: 6, kind: input, shape index: {}]
  %s7 = inlined_call_operand.vmem [shape: f32[8,2], index: 7, kind: output, shape index: {}]
  %s8 = sld [smem:[#allocation0]]
  $region38: #{tpu_custom_call.1} parent=0
    _
  %s10 = ssub.s32 1, %s8
  %s11 = scalar_select 0, %s10, %s8
  // Predicated region
  $region2: #{tpu_custom_call.1} parent=0 // pred_check
    _
  $region3: #{tpu_custom_call.1} parent=0 // pred_check_branch
    %13 = sbr.rel (0) target = $region5
  $region4: #{tpu_custom_call.1} parent=0 // pred_region
    _
  $region5: #{tpu_custom_call.1} parent=0 // pred_fallthru
    _
  // Predicated region
  $region6: #{tpu_custom_call.1} parent=0 // pred_check
    _
  $region7: #{tpu_custom_call.1} parent=0 // pred_check_branch
    %15 = sbr.rel (0) target = $region9
  $region8: #{tpu_custom_call.1} parent=0 // pred_region
    _
  $region9: #{tpu_custom_call.1} parent=0 // pred_fallthru
    _
  // Predicated region
  $region10: #{tpu_custom_call.1} parent=0 // pred_check
    _
  $region11: #{tpu_custom_call.1} parent=0 // pred_check_branch
    %17 = sbr.rel (0) target = $region13
  $region12: #{tpu_custom_call.1} parent=0 // pred_region
    _
  $region13: #{tpu_custom_call.1} parent=0 // pred_fallthru
    _
  // Predicated region
  $region14: #{tpu_custom_call.1} parent=0 // pred_check
    _
  $region15: #{tpu_custom_call.1} parent=0 // pred_check_branch
    %19 = sbr.rel (0) target = $region17
  $region16: #{tpu_custom_call.1} parent=0 // pred_region
    _
  $region17: #{tpu_custom_call.1} parent=0 // pred_fallthru
    _
  // Predicated region
  $region18: #{tpu_custom_call.1} parent=0 // pred_check
    _
  $region19: #{tpu_custom_call.1} parent=0 // pred_check_branch
    %21 = sbr.rel (0) target = $region21
  $region20: #{tpu_custom_call.1} parent=0 // pred_region
    _
  $region21: #{tpu_custom_call.1} parent=0 // pred_fallthru
    _
  // Predicated region
  $region22: #{tpu_custom_call.1} parent=0 // pred_check
    _
  $region23: #{tpu_custom_call.1} parent=0 // pred_check_branch
    %23 = sbr.rel (0) target = $region25
  $region24: #{tpu_custom_call.1} parent=0 // pred_region
    _
  $region25: #{tpu_custom_call.1} parent=0 // pred_fallthru
    _
  // Predicated region
  $region26: #{tpu_custom_call.1} parent=0 // pred_check
    _
  $region27: #{tpu_custom_call.1} parent=0 // pred_check_branch
    %25 = sbr.rel (0) target = $region29
  $region28: #{tpu_custom_call.1} parent=0 // pred_region
    _
  $region29: #{tpu_custom_call.1} parent=0 // pred_fallthru
    _
  %v26 = vld [vmem:[%s0] sm:$0x3]
  %v27 = vld [vmem:[%s1] sm:$0xff]
  %v28 = vld [vmem:[%s2] sm:$0x1]
  %v30 = vperm.slane %v28, 0
  %vm32 = vcmask 64512
  %v34 = vsel %vm32, %v26, 0
  %36 = vmatpush.msra.mxu0 0.0
  %37 = vmatpush.msra.mxu0 0.0
  %38 = vmatpush.msra.mxu0 0.0
  %39 = vmatpush.msra.mxu0 0.0
  %40 = vmatpush.msra.mxu0 0.0
  %41 = vmatpush.msra.mxu0 0.0
  %42 = vmatpush.msra.mxu0 0.0
  %43 = vmatpush.msra.mxu0 0.0
  %44 = vmatpush.msra.mxu0 0.0
  %45 = vmatpush.msra.mxu0 0.0
  %46 = vmatpush.msra.mxu0 0.0
  %47 = vmatpush.msra.mxu0 0.0
  %48 = vmatpush.msra.mxu0 0.0
  %49 = vmatpush.msra.mxu0 0.0
  %50 = vmatpush.msra.mxu0 0.0
  %51 = vmatpush.msra.mxu0 %v27
  %52 = vmatmul.f32.gmra.mxu0 %v34
  %v53 = vpop.f32.mrf.mxu0
  %v54 = vadd.f32 %v30, %v53
  %55 = vdwg.mxu0
  %v56 = vmax.f32 %v54, 0.0
  %v57 = vld [vmem:[%s3] sm:$0xff]
  %v58 = vld [vmem:[%s3 + $0x8] sm:$0xff]
  %v59 = vld [vmem:[%s3 + $0x10] sm:$0xff]
  %v60 = vld [vmem:[%s3 + $0x18] sm:$0xff]
  %v61 = vld [vmem:[%s3 + $0x20] sm:$0xff]
  %v62 = vld [vmem:[%s3 + $0x28] sm:$0xff]
  %v63 = vld [vmem:[%s3 + $0x30] sm:$0xff]
  %v64 = vld [vmem:[%s3 + $0x38] sm:$0xff]
  %v65 = vld [vmem:[%s3 + $0x40] sm:$0xff]
  %v66 = vld [vmem:[%s3 + $0x48] sm:$0xff]
  %v67 = vld [vmem:[%s3 + $0x50] sm:$0xff]
  %v68 = vld [vmem:[%s3 + $0x58] sm:$0xff]
  %v69 = vld [vmem:[%s3 + $0x60] sm:$0xff]
  %v70 = vld [vmem:[%s3 + $0x68] sm:$0xff]
  %v71 = vld [vmem:[%s3 + $0x70] sm:$0xff]
  %v72 = vld [vmem:[%s3 + $0x78] sm:$0xff]
  %v73 = vld [vmem:[%s4] sm:$0x1]
  %v75 = vperm.slane %v73, 0
  %77 = vmatpush.msra.mxu0 %v72
  %78 = vmatpush.msra.mxu0 %v71
  %79 = vmatpush.msra.mxu0 %v70
  %80 = vmatpush.msra.mxu0 %v69
  %81 = vmatpush.msra.mxu0 %v68
  %82 = vmatpush.msra.mxu0 %v67
  %83 = vmatpush.msra.mxu0 %v66
  %84 = vmatpush.msra.mxu0 %v65
  %85 = vmatpush.msra.mxu0 %v64
  %86 = vmatpush.msra.mxu0 %v63
  %87 = vmatpush.msra.mxu0 %v62
  %88 = vmatpush.msra.mxu0 %v61
  %89 = vmatpush.msra.mxu0 %v60
  %90 = vmatpush.msra.mxu0 %v59
  %91 = vmatpush.msra.mxu0 %v58
  %92 = vmatpush.msra.mxu0 %v57
  %93 = vmatmul.f32.gmra.mxu0 %v56
  %v94 = vpop.f32.mrf.mxu0
  %v95 = vadd.f32 %v75, %v94
  %96 = vdwg.mxu0
  %v97 = vmax.f32 %v95, 0.0
  %v98 = vld [vmem:[%s5] sm:$0xff]
  %v99 = vld [vmem:[%s6] sm:$0xff]
  %101 = vset.pattern.permute.xlu0 0
  %102 = vperm.xlu0 %101, %v99
  %v103 = vpop.permute.xlu0 %102
  %vm105 = vcmask 523264
  %v107 = vsel %vm105, %v98, 0
  %v110 = vsel %vm105, %v97, 0
  %112 = vmatpush.xpose.msra.mxu0 0.0
  %113 = vmatpush.xpose.msra.mxu0 0.0
  %114 = vmatpush.xpose.msra.mxu0 0.0
  %115 = vmatpush.xpose.msra.mxu0 0.0
  %116 = vmatpush.xpose.msra.mxu0 0.0
  %117 = vmatpush.xpose.msra.mxu0 0.0
  %118 = vmatpush.xpose.msra.mxu0 0.0
  %119 = vmatpush.xpose.msra.mxu0 0.0
  %120 = vmatpush.xpose.msra.mxu0 0.0
  %121 = vmatpush.xpose.msra.mxu0 0.0
  %122 = vmatpush.xpose.msra.mxu0 0.0
  %123 = vmatpush.xpose.msra.mxu0 0.0
  %124 = vmatpush.xpose.msra.mxu0 0.0
  %125 = vmatpush.xpose.msra.mxu0 0.0
  %126 = vmatpush.xpose.msra.mxu0 0.0
  %127 = vmatpush.xpose.msra.mxu0 %v110
  %128 = vmatmul.f32.gmra.mxu0 %v107
  %v129 = vpop.f32.mrf.mxu0
  %v130 = vadd.f32 %v103, %v129
  %131 = vdwg.mxu0
  %vm132 = vcmask 15360
  %133 = vst.msk [vmem:[%s7] sm:$0xff] %vm132, %v130
  // Predicated region
  $region30: #{tpu_custom_call.1} parent=0 // pred_check
    _
  $region31: #{tpu_custom_call.1} parent=0 // pred_check_branch
    %135 = sbr.rel (0) target = $region33
  $region32: #{tpu_custom_call.1} parent=0 // pred_region
    _
  $region33: #{tpu_custom_call.1} parent=0 // pred_fallthru
    _
  // Predicated region
  $region34: #{tpu_custom_call.1} parent=0 // pred_check
    _
  $region35: #{tpu_custom_call.1} parent=0 // pred_check_branch
    %137 = sbr.rel (0) target = $region37
  $region36: #{tpu_custom_call.1} parent=0 // pred_region
    _
  $region37: #{tpu_custom_call.1} parent=0 // pred_fallthru
    _

</llo_original>
